<compile_context>
chip_gen: v6e
topology: v6e:2x2x1
jax: 0.10.0
libtpu: 0.0.40
codegen_flags: <defaults>
</compile_context>

<pallas_src>
import functools

import jax
import jax.numpy as jnp
from jax.experimental import pallas as pl
from jax.experimental.pallas import tpu as pltpu


_LANE = 128
_SUBLANE = 8
# Conservative per-generation streaming budget (v5e default scoped VMEM is
# 16 MiB; we raise the limit to 32 MiB below, which is also legal on v7x's
# 64 MiB physical VMEM, and budget 24 MiB of it for streams + temps).
_VMEM_STREAM_BUDGET = 24 * 1024 * 1024
_VMEM_LIMIT_BYTES = 32 * 1024 * 1024


def _auto_tile_n(n, c, logits_itemsize):
    """Pick tile_n from a VMEM bytes budget (lane padding included)."""
    pad_c = max(pl.cdiv(c, _LANE) * _LANE, _LANE)
    # Double-buffered input streams per row:
    #   logits: pad_c * itemsize; targets + alpha_eff sidecars lane-pad 1->128.
    stream_bytes = 2 * (pad_c * logits_itemsize + 2 * _LANE * 4)
    # f32 compute temps per row (cast x, exp, select) ~ 3 padded blocks.
    temp_bytes = 3 * pad_c * 4
    per_row = stream_bytes + temp_bytes
    tile = _VMEM_STREAM_BUDGET // per_row
    tile = min(int(tile), 8192, n)
    if tile >= n:
        return n                      # full-extent block: always legal
    tile = max((tile // _SUBLANE) * _SUBLANE, _SUBLANE)
    return tile


def _focal_loss_kernel(logits_ref, targets_ref, alpha_ref, out_ref, *,
                       gamma, tile_n, n_valid, mask_tail):
    x = logits_ref[...].astype(jnp.float32)                 # (TILE_N, C)

    # Row-wise stable softmax statistics (no full softmax matrix).
    m = jnp.max(x, axis=-1, keepdims=True)                  # (TILE_N, 1)
    e = jnp.exp(x - m)                                      # (TILE_N, C)
    s = jnp.sum(e, axis=-1, keepdims=True)                  # (TILE_N, 1)

    # One-hot gather of the target-class numerator via select (no f32 mask).
    col = jax.lax.broadcasted_iota(jnp.int32, x.shape, 1)   # (TILE_N, C)
    tgt = targets_ref[...]                                  # (TILE_N, 1) int32
    g = jnp.sum(jnp.where(col == tgt, e, 0.0),
                axis=-1, keepdims=True)                     # (TILE_N, 1)

    probs = jnp.clip(g / s, 0.0001, 1.0)                    # (TILE_N, 1)
    log_p = jnp.log(probs)
    one_m = 1.0 - probs

    # gamma specialization: integer power -> multiply chain (no pow/exp/log).
    g_int = int(gamma)
    if float(gamma) == float(g_int) and 0 <= g_int <= 8:
        if g_int == 0:
            focal = jnp.ones_like(one_m)
        else:
            focal = one_m
            for _ in range(g_int - 1):
                focal = focal * one_m
    else:
        focal = one_m ** jnp.float32(gamma)

    # alpha_ref already carries alpha[target] * global_weight (merged in the
    # wrapper), so a single multiply covers both.
    batch_loss = -alpha_ref[...] * focal * log_p             # (TILE_N, 1)

    if mask_tail:
        # Padded tail rows read unspecified VMEM; select (NOT multiply) so any
        # Inf/NaN there cannot leak into the tile sum.
        row = (pl.program_id(0) * tile_n
               + jax.lax.broadcasted_iota(jnp.int32, batch_loss.shape, 0))
        batch_loss = jnp.where(row < n_valid, batch_loss, 0.0)

    out_ref[...] = jnp.sum(batch_loss).reshape(1, 1, 1)


def focal_loss(logits, targets, alpha, global_weight=None, *,
               gamma=2.0, size_average=True, tile_n=None):
    """Pallas FocalLoss forward (softmax path, reduce=True)."""
    N, C = logits.shape
    targets_flat = targets.reshape(-1).astype(jnp.int32)
    targets2d = targets_flat.reshape(N, 1)

    # alpha[target] gather (tiny XLA gather) fused with the global_weight
    # multiply -> a single (N, 1) f32 sidecar stream into the kernel.
    # (The torch module only applies global_weight on the size_average branch.)
    alpha_eff = alpha.reshape(-1).astype(jnp.float32)[targets_flat]
    if size_average and (global_weight is not None):
        alpha_eff = alpha_eff * global_weight.reshape(-1).astype(jnp.float32)
    alpha_eff = alpha_eff.reshape(N, 1)

    if tile_n is None:
        tile_n = _auto_tile_n(N, C, jnp.dtype(logits.dtype).itemsize)
    tile_n = int(tile_n)
    if tile_n >= N:
        tile_n = N
    elif tile_n % _SUBLANE != 0:
        tile_n = max(_SUBLANE, (tile_n // _SUBLANE) * _SUBLANE)
    num_tiles = pl.cdiv(N, tile_n)
    mask_tail = (N % tile_n) != 0

    kernel = functools.partial(
        _focal_loss_kernel,
        gamma=float(gamma),
        tile_n=tile_n,
        n_valid=int(N),
        mask_tail=bool(mask_tail),
    )

    # Per-tile partial sums; the "parallel" grid axis lets v7x's two
    # TensorCores each stream half the tiles (single-TC v5e/v6e unaffected).
    partials = pl.pallas_call(
        kernel,
        out_shape=jax.ShapeDtypeStruct((num_tiles, 1, 1), jnp.float32),
        grid=(num_tiles,),
        in_specs=[
            pl.BlockSpec((tile_n, C), lambda i: (i, 0)),
            pl.BlockSpec((tile_n, 1), lambda i: (i, 0)),
            pl.BlockSpec((tile_n, 1), lambda i: (i, 0)),
        ],
        out_specs=pl.BlockSpec((1, 1, 1), lambda i: (i, 0, 0)),
        compiler_params=pltpu.CompilerParams(
            dimension_semantics=("parallel",),
            vmem_limit_bytes=_VMEM_LIMIT_BYTES),
    )(logits, targets2d, alpha_eff)

    total = jnp.sum(partials)
    if size_average:
        return total / jnp.float32(N)
    return total


def focal_loss_ref(logits, targets, alpha, global_weight=None,
                   gamma=2.0, size_average=True):
    """Pure-JAX reference mirroring the PyTorch module (softmax, reduce=True)."""
    p = jax.nn.softmax(logits.astype(jnp.float32), axis=-1)
    probs = jnp.take_along_axis(p, targets.reshape(-1, 1), axis=1)
    probs = jnp.clip(probs, 0.0001, 1.0)
    a = alpha.reshape(-1)[targets].reshape(-1, 1)
    batch_loss = -a * (1.0 - probs) ** gamma * jnp.log(probs)
    if size_average:
        if global_weight is not None:
            batch_loss = batch_loss * global_weight.reshape(-1, 1)
        return jnp.mean(batch_loss)
    return jnp.sum(batch_loss)


if __name__ == "__main__":
    # Small shapes consistent with the module: batch of logits over class_num.
    N, C = 8, 18          # class_num = 18 (Votenet semantic classes)
    key = jax.random.PRNGKey(0)
    k1, k2, k3, k4, k5 = jax.random.split(key, 5)

    logits = jax.random.normal(k1, (N, C), dtype=jnp.float32)
    targets = jax.random.randint(k2, (N,), 0, C, dtype=jnp.int32)
    alpha = jnp.ones((C,), jnp.float32)       # __init__ alpha=None -> ones
    gweight = jax.random.uniform(k3, (N,), dtype=jnp.float32)

    # Default path: size_average=True, no global_weight (auto tile -> 1 tile).
    loss = focal_loss(logits, targets, alpha, gamma=2.0, size_average=True)
    loss = jax.block_until_ready(loss)
    ref = focal_loss_ref(logits, targets, alpha, gamma=2.0, size_average=True)
    assert jnp.allclose(loss, ref, rtol=1e-5, atol=1e-6), (loss, ref)

    # size_average=True with global_weight (merged into the alpha_eff stream).
    loss_w = focal_loss(logits, targets, alpha, gweight,
                        gamma=2.0, size_average=True)
    loss_w = jax.block_until_ready(loss_w)
    ref_w = focal_loss_ref(logits, targets, alpha, gweight,
                           gamma=2.0, size_average=True)
    assert jnp.allclose(loss_w, ref_w, rtol=1e-5, atol=1e-6), (loss_w, ref_w)

    # size_average=False (sum reduction).
    loss_s = focal_loss(logits, targets, alpha, gamma=2.0, size_average=False)
    loss_s = jax.block_until_ready(loss_s)
    ref_s = focal_loss_ref(logits, targets, alpha, gamma=2.0,
                           size_average=False)
    assert jnp.allclose(loss_s, ref_s, rtol=1e-5, atol=1e-6), (loss_s, ref_s)

    # Multi-tile grid path with a padded tail tile (exercises row masking and
    # the per-tile partial-sum reduction): N=40, forced tile_n=16 -> 3 tiles.
    N2 = 40
    logits2 = jax.random.normal(k4, (N2, C), dtype=jnp.float32)
    targets2 = jax.random.randint(k5, (N2,), 0, C, dtype=jnp.int32)
    loss_t = focal_loss(logits2, targets2, alpha, gamma=2.0,
                        size_average=True, tile_n=16)
    loss_t = jax.block_until_ready(loss_t)
    ref_t = focal_loss_ref(logits2, targets2, alpha, gamma=2.0,
                           size_average=True)
    assert jnp.allclose(loss_t, ref_t, rtol=1e-5, atol=1e-6), (loss_t, ref_t)

    print("KERNEL_OK")
</pallas_src>

<mosaic_0001>
module attributes {stable_mosaic.version = 11 : i64} {
  func.func @_focal_loss_kernel(%arg0: i32, %arg1: memref<8x18xf32, #tpu.memory_space<vmem>>, %arg2: memref<8x1xi32, #tpu.memory_space<vmem>>, %arg3: memref<8x1xf32, #tpu.memory_space<vmem>>, %arg4: memref<1x1x1xf32, #tpu.memory_space<vmem>>) attributes {dimension_semantics = [#tpu.dimension_semantics<parallel>], iteration_bounds = array<i64: 1>, scalar_prefetch = 0 : i64, scratch_operands = 0 : i64, tpu.core_type = #tpu.core_type<tc>, window_params = [{transform_indices = @transform_0, window_bounds = array<i64: 8, 18>}, {transform_indices = @transform_1, window_bounds = array<i64: 8, 1>}, {transform_indices = @transform_2, window_bounds = array<i64: 8, 1>}, {transform_indices = @transform_3, window_bounds = array<i64: 1, 1, 1>}]} {
    %c0 = arith.constant 0 : index
    %c0_0 = arith.constant 0 : index
    %0 = vector.load %arg1[%c0, %c0_0] : memref<8x18xf32, #tpu.memory_space<vmem>>, vector<8x18xf32>
    %cst = arith.constant dense<0xFF800000> : vector<8xf32>
    %1 = vector.multi_reduction <maximumf>, %0, %cst [1] : vector<8x18xf32> to vector<8xf32>
    %2 = vector.shape_cast %1 : vector<8xf32> to vector<8x1xf32>
    %3 = vector.broadcast %2 : vector<8x1xf32> to vector<8x18xf32>
    %4 = arith.subf %0, %3 : vector<8x18xf32>
    %5 = math.exp %4 : vector<8x18xf32>
    %cst_1 = arith.constant dense<0.000000e+00> : vector<8xf32>
    %6 = vector.multi_reduction <add>, %5, %cst_1 [1] : vector<8x18xf32> to vector<8xf32>
    %7 = vector.shape_cast %6 : vector<8xf32> to vector<8x1xf32>
    %8 = tpu.iota {dimensions = array<i32: 1>} : vector<8x18xi32>
    %c0_2 = arith.constant 0 : index
    %c0_3 = arith.constant 0 : index
    %9 = vector.load %arg2[%c0_2, %c0_3] : memref<8x1xi32, #tpu.memory_space<vmem>>, vector<8x1xi32>
    %10 = vector.broadcast %9 : vector<8x1xi32> to vector<8x18xi32>
    %11 = arith.cmpi eq, %8, %10 : vector<8x18xi32>
    %cst_4 = arith.constant 0.000000e+00 : f32
    %12 = vector.broadcast %cst_4 : f32 to vector<8x18xf32>
    %13 = arith.select %11, %5, %12 : vector<8x18xi1>, vector<8x18xf32>
    %cst_5 = arith.constant dense<0.000000e+00> : vector<8xf32>
    %14 = vector.multi_reduction <add>, %13, %cst_5 [1] : vector<8x18xf32> to vector<8xf32>
    %15 = vector.shape_cast %14 : vector<8xf32> to vector<8x1xf32>
    %16 = arith.divf %15, %7 : vector<8x1xf32>
    %cst_6 = arith.constant 9.99999974E-5 : f32
    %cst_7 = arith.constant 1.000000e+00 : f32
    %17 = vector.broadcast %cst_6 : f32 to vector<8x1xf32>
    %18 = arith.maximumf %17, %16 : vector<8x1xf32>
    %19 = vector.broadcast %cst_7 : f32 to vector<8x1xf32>
    %20 = arith.minimumf %19, %18 : vector<8x1xf32>
    %21 = math.log %20 : vector<8x1xf32>
    %cst_8 = arith.constant 1.000000e+00 : f32
    %22 = vector.broadcast %cst_8 : f32 to vector<8x1xf32>
    %23 = arith.subf %22, %20 : vector<8x1xf32>
    %24 = arith.mulf %23, %23 : vector<8x1xf32>
    %c0_9 = arith.constant 0 : index
    %c0_10 = arith.constant 0 : index
    %25 = vector.load %arg3[%c0_9, %c0_10] : memref<8x1xf32, #tpu.memory_space<vmem>>, vector<8x1xf32>
    %cst_11 = arith.constant 0.000000e+00 : f32
    %26 = vector.broadcast %cst_11 : f32 to vector<8x1xf32>
    %27 = arith.subf %26, %25 : vector<8x1xf32>
    %28 = arith.mulf %27, %24 : vector<8x1xf32>
    %29 = arith.mulf %28, %21 : vector<8x1xf32>
    %30 = vector.shape_cast %29 : vector<8x1xf32> to vector<1x8x1xf32>
    %cst_12 = arith.constant dense<0.000000e+00> : vector<1xf32>
    %31 = vector.multi_reduction <add>, %30, %cst_12 [1, 2] : vector<1x8x1xf32> to vector<1xf32>
    %32 = vector.shape_cast %31 : vector<1xf32> to vector<1x1x1xf32>
    %33 = vector.extract %32[0, 0, 0] : f32 from vector<1x1x1xf32>
    %34 = vector.broadcast %33 : f32 to vector<1x1x1xf32>
    %c0_13 = arith.constant 0 : index
    %c0_14 = arith.constant 0 : index
    %c0_15 = arith.constant 0 : index
    %35 = vector.load %arg4[%c0_13, %c0_14, %c0_15] : memref<1x1x1xf32, #tpu.memory_space<vmem>>, vector<1x1x1xf32>
    tpu.vector_store %arg4[%c0_13, %c0_14, %c0_15], %34 {strides = array<i32>} : memref<1x1x1xf32, #tpu.memory_space<vmem>>, vector<1x1x1xf32>,
    return
  }
  func.func @transform_0(%arg0: i32) -> (i32, i32) {
    %c0_i32 = arith.constant 0 : i32
    %c0_i32_0 = arith.constant 0 : i32
    return %arg0, %c0_i32 : i32, i32
  }
  func.func @transform_1(%arg0: i32) -> (i32, i32) {
    %c0_i32 = arith.constant 0 : i32
    %c0_i32_0 = arith.constant 0 : i32
    return %arg0, %c0_i32 : i32, i32
  }
  func.func @transform_2(%arg0: i32) -> (i32, i32) {
    %c0_i32 = arith.constant 0 : i32
    %c0_i32_0 = arith.constant 0 : i32
    return %arg0, %c0_i32 : i32, i32
  }
  func.func @transform_3(%arg0: i32) -> (i32, i32, i32) {
    %c0_i32 = arith.constant 0 : i32
    %c0_i32_0 = arith.constant 0 : i32
    %c0_i32_1 = arith.constant 0 : i32
    return %arg0, %c0_i32, %c0_i32_0 : i32, i32, i32
  }
}

</mosaic_0001>

<llo_original>
// kernel: tpu_custom_call.1
$region0: #{tpu_custom_call.1}
  #allocation0 [shape = 'u32[]', space=smem, size = 0x4, offset = 0x4, fixed_abs, tag = 'smem constant byte address 0x4 - core index']
  #allocation1 [shape = 'u32[144,128]{1,0:T(1,128)}', space=vmem, size = 0x12000, scoped, tag = 'internal scratch']
  %s0 = inlined_call_operand.vmem [shape: f32[8,18], index: 0, kind: input, shape index: {}]
  %s1 = inlined_call_operand.vmem [shape: s32[8,1], index: 1, kind: input, shape index: {}]
  %s2 = inlined_call_operand.vmem [shape: f32[8,1], index: 2, kind: input, shape index: {}]
  %s3 = inlined_call_operand.hbm [shape: f32[1,1,1], index: 3, kind: output, shape index: {}]
  %s4 = sld [smem:[#allocation0]]
  $region22: #{tpu_custom_call.1} parent=0
    _
  %s6 = ssub.s32 1, %s4
  %s7 = scalar_select 0, %s6, %s4
  $region1: #{tpu_custom_call.1} parent=0
    #allocation2 [shape = 'u8[512]{0}', space=vmem, size = 0x400, scoped, tag = 'output window, operand 0, single buffered']
    #allocation3 [shape = 's32[1]{0}', space=sflag, size = 0x4, scoped, tag = 'scoped memory for tpu_custom_call.1']
    %8 = vsyncpa [#allocation3], 0
    // Predicated region
    $region2: #{tpu_custom_call.1} parent=1 // pred_check
      _
    $region3: #{tpu_custom_call.1} parent=1 // pred_check_branch
      %10 = sbr.rel (0) target = $region5
    $region4: #{tpu_custom_call.1} parent=1 // pred_region
      _
    $region5: #{tpu_custom_call.1} parent=1 // pred_fallthru
      _
    // Predicated region
    $region6: #{tpu_custom_call.1} parent=1 // pred_check
      _
    $region7: #{tpu_custom_call.1} parent=1 // pred_check_branch
      %12 = sbr.rel (0) target = $region9
    $region8: #{tpu_custom_call.1} parent=1 // pred_region
      _
    $region9: #{tpu_custom_call.1} parent=1 // pred_fallthru
      _
    // Predicated region
    $region10: #{tpu_custom_call.1} parent=1 // pred_check
      _
    $region11: #{tpu_custom_call.1} parent=1 // pred_check_branch
      %14 = sbr.rel (0) target = $region13
    $region12: #{tpu_custom_call.1} parent=1 // pred_region
      _
    $region13: #{tpu_custom_call.1} parent=1 // pred_fallthru
      _
    %v15 = vld [vmem:[%s0] sm:$0xff]
    %vm16 = vcmask 146432
    %v17 = vsel %vm16, %v15, -inf
    %18 = vmax.xlane.f32.xlu0 %v17
    %v19 = vpop.xlane.xlu0 %18
    %v20 = vsub.f32 %v15, %v19
    %v21 = vmul.f32 %v20, 1.442695
    %v22 = vpow.pop %v21
    %v23 = vsel %vm16, %v22, 0.0
    %24 = vadd.xlane.f32.xlu0 %v23
    %v25 = vpop.xlane.xlu0 %24
    %v26 = vlaneseq
    %v27 = vand.u32 %v26, 127
    %v28 = vld [vmem:[%s1] sm:$0xff]
    %29 = vset.pattern.permute.xlu0 0
    %30 = vperm.xlu0 %29, %v28
    %v31 = vpop.permute.xlu0 %30
    %vm32 = vcmp.eq.s32.totalorder %v27, %v31
    %v33 = vsel %vm32, %v22, 0.0
    %v34 = vsel %vm16, %v33, 0.0
    %35 = vadd.xlane.f32.xlu0 %v34
    %v36 = vpop.xlane.xlu0 %35
    %v37 = vrcp.pop %v25
    %v38 = vmul.f32 %v36, %v37
    %v39 = vmax.f32 %v38, 0.0001
    %v40 = vmin.f32 %v39, 1.0
    %v41 = vlog2.pop %v40
    %v42 = vmul.f32 %v41, 0.6931472
    %v43 = vsub.f32 1.0, %v40
    %v44 = vmul.f32 %v43, %v43
    %v45 = vld [vmem:[%s2] sm:$0xff]
    %v46 = vsub.f32 0.0, %v45
    %v47 = vmul.f32 %v46, %v44
    %v48 = vmul.f32 %v47, %v42
    %vm49 = vcmask 7168
    %v50 = vsel %vm49, %v48, 0.0
    %51 = vadd.xlane.f32.xlu0 %v50
    %v52 = vpop.xlane.xlu0 %51
    %v53 = vrot.slane %v52, 4
    %v54 = vadd.f32 %v52, %v53
    %v55 = vrot.slane %v54, 2
    %v56 = vadd.f32 %v54, %v55
    %v57 = vrot.slane %v56, 1
    %v58 = vadd.f32 %v56, %v57
    %s59 = vtos %v58
    %v60 = vstv %s59
    %vm61 = vcmask 0
    %62 = vst.msk [vmem:[#allocation2] sm:$0x1] %vm61, %v60
    // Predicated region
    $region14: #{tpu_custom_call.1} parent=1 // pred_check
      _
    $region15: #{tpu_custom_call.1} parent=1 // pred_check_branch
      %64 = sbr.rel (0) target = $region17
    $region16: #{tpu_custom_call.1} parent=1 // pred_region
      %s66 = ssub.s32 16, 16
      %67 = vsyncadd [#allocation3], %s66
      %s69 = sshll.u32 [#allocation2], 4
      %s70 = int_to_ptr.vmem [resolvable:$true] %s69
      %72 = dma.vmem_to_hbm [thread:$0]  %s70, 16, %s3, [#allocation3]
    $region17: #{tpu_custom_call.1} parent=1 // pred_fallthru
      _
    // Predicated region
    $region18: #{tpu_custom_call.1} parent=1 // pred_check
      _
    $region19: #{tpu_custom_call.1} parent=1 // pred_check_branch
      %74 = sbr.rel (0) target = $region21
    $region20: #{tpu_custom_call.1} parent=1 // pred_region
      %75 = dma.done [#allocation3], 16
    $region21: #{tpu_custom_call.1} parent=1 // pred_fallthru
      _
    %76 = vsyncpa [#allocation3], 1

</llo_original>
